<compile_context>
chip_gen: v7x
topology: tpu7x:2x2x1
jax: 0.10.0
libtpu: 0.0.40
codegen_flags: <defaults>
</compile_context>

<pallas_src>
import functools

import jax
import jax.numpy as jnp
from jax import lax
from jax.experimental import pallas as pl
from jax.experimental.pallas import tpu as pltpu


def _addcoords_kernel(x_ref, o_ref, *, C, H, W, T):
    """x_ref: (Bt, C, T) block; o_ref: (Bt, C+3, T) block; T = flattened H*W tile."""
    bt = x_ref.shape[0]

    # ---- pass-through of the input channels: one lane-dense full-block store ----
    o_ref[:, :C, :] = x_ref[...]

    # ---- coordinate channels for this flat tile (depend only on spatial pos) ----
    t = pl.program_id(1)
    base = t * T                                              # global flat offset of this tile
    p = base + lax.broadcasted_iota(jnp.int32, (1, T), 1)     # global flat index
    p_f = p.astype(jnp.float32)                               # exact: H*W < 2**24
    w_f = jnp.float32(W)

    q = jnp.floor(p_f / w_f)          # row index (along H)
    c = p_f - q * w_f                 # col index (along W); q*w_f and diff are exact
    # fp-rounding fix-up so (q, c) are exactly (p // W, p % W)
    lo = c < 0.0
    q = jnp.where(lo, q - 1.0, q)
    c = jnp.where(lo, c + w_f, c)
    hi = c >= w_f
    q = jnp.where(hi, q + 1.0, q)
    c = jnp.where(hi, c - w_f, c)

    # normalization via constant reciprocals (H, W are static Python ints; H, W > 1)
    xx = q * jnp.float32(2.0 / (H - 1)) - 1.0
    yy = c * jnp.float32(2.0 / (W - 1)) - 1.0
    rr = jnp.sqrt(xx * xx + yy * yy)

    coords = jnp.concatenate([xx, yy, rr], axis=0).astype(o_ref.dtype)   # (3, T)
    o_ref[:, C:, :] = jnp.broadcast_to(coords[None], (bt, 3, T))


def _choose_tiles(B, C, H, W, itemsize, *, block_budget_bytes=2 << 20,
                  min_block_bytes=1 << 20):
    """Pick (batch tile, flattened-HW tile) under a per-step VMEM budget."""
    HW = H * W
    per_elem = (2 * C + 3) * itemsize            # in-block + out-block bytes per flat element
    per_image = per_elem * HW

    # flattened-spatial tile: multiple of 128 lanes, or the full extent (always legal)
    if per_image <= block_budget_bytes:
        T = HW
    else:
        T = (block_budget_bytes // per_elem) // 128 * 128
        T = max(128, min(T, HW))

    per_batch_block = per_elem * T
    # pack batch elements until a step moves ~min_block_bytes, staying in budget
    Bt = min(B,
             max(1, min_block_bytes // per_batch_block),
             max(1, block_budget_bytes // per_batch_block))
    Bt = max(1, Bt)
    if B >= 2:                                   # keep >= 2 grid steps for v7x's two TCs
        Bt = min(Bt, -(-B // 2))
    if B == 1 and T == HW and T >= 256 and T % 256 == 0:
        T //= 2                                  # single small image: split so both TCs get work
    return Bt, T


def add_coords(x, *, block_budget_bytes=2 << 20):
    """x: (B, C, H, W) -> (B, C+3, H, W), matching AddCoords.forward (NCHW)."""
    B, C, H, W = x.shape
    if H <= 1 or W <= 1:
        raise ValueError("AddCoords needs H > 1 and W > 1 (PyTorch divides by H-1 / W-1).")
    HW = H * W
    if HW >= (1 << 24):
        raise ValueError("H*W must be < 2**24 for exact float32 flat-index math.")

    itemsize = jnp.dtype(x.dtype).itemsize
    Bt, T = _choose_tiles(B, C, H, W, itemsize, block_budget_bytes=block_budget_bytes)
    n_b = -(-B // Bt)
    n_t = -(-HW // T)

    xf = x.reshape(B, C, HW)                     # metadata-only on contiguous NCHW

    kernel = functools.partial(_addcoords_kernel, C=C, H=H, W=W, T=T)
    out_flat = pl.pallas_call(
        kernel,
        out_shape=jax.ShapeDtypeStruct((B, C + 3, HW), x.dtype),
        grid_spec=pltpu.PrefetchScalarGridSpec(
            num_scalar_prefetch=0,
            grid=(n_b, n_t),
            in_specs=[pl.BlockSpec((Bt, C, T), lambda b, t: (b, 0, t))],
            out_specs=pl.BlockSpec((Bt, C + 3, T), lambda b, t: (b, 0, t)),
        ),
        compiler_params=pltpu.CompilerParams(
            dimension_semantics=("parallel", "parallel"),
            vmem_limit_bytes=32 << 20,
        ),
    )(xf)
    return out_flat.reshape(B, C + 3, H, W)


def add_coords_ref(x):
    """Pure-JAX reference mirroring the PyTorch forward."""
    B, C, H, W = x.shape
    row = jnp.arange(H, dtype=jnp.int32)[:, None] * jnp.ones((1, W), jnp.int32)
    col = jnp.ones((H, 1), jnp.int32) * jnp.arange(W, dtype=jnp.int32)[None, :]
    xx = row.astype(jnp.float32) / (H - 1) * 2.0 - 1.0
    yy = col.astype(jnp.float32) / (W - 1) * 2.0 - 1.0
    xx = jnp.broadcast_to(xx[None, None], (B, 1, H, W))
    yy = jnp.broadcast_to(yy[None, None], (B, 1, H, W))
    rr = jnp.sqrt(xx ** 2 + yy ** 2)
    return jnp.concatenate([x, xx.astype(x.dtype), yy.astype(x.dtype),
                            rr.astype(x.dtype)], axis=1)


if __name__ == "__main__":
    key = jax.random.PRNGKey(0)
    B, C, H, W = 2, 4, 16, 16
    x = jax.random.normal(key, (B, C, H, W), dtype=jnp.float32)

    out = add_coords(x)
    out = jax.block_until_ready(out)

    ref = add_coords_ref(x)
    assert out.shape == (B, C + 3, H, W), out.shape
    assert out.dtype == x.dtype, out.dtype
    assert jnp.allclose(out, ref, atol=1e-5, rtol=1e-5), "mismatch vs reference"

    print("KERNEL_OK")
</pallas_src>

<mosaic_0001>
module attributes {stable_mosaic.version = 11 : i64} {
  func.func @_addcoords_kernel(%arg0: i32, %arg1: i32, %arg2: memref<1x4x256xf32, #tpu.memory_space<vmem>>, %arg3: memref<1x7x256xf32, #tpu.memory_space<vmem>>) attributes {dimension_semantics = [#tpu.dimension_semantics<parallel>, #tpu.dimension_semantics<parallel>], iteration_bounds = array<i64: 2, 1>, scalar_prefetch = 0 : i64, scratch_operands = 0 : i64, tpu.core_type = #tpu.core_type<tc>, window_params = [{transform_indices = @transform_0, window_bounds = array<i64: 1, 4, 256>}, {transform_indices = @transform_1, window_bounds = array<i64: 1, 7, 256>}]} {
    %c0 = arith.constant 0 : index
    %c0_0 = arith.constant 0 : index
    %c0_1 = arith.constant 0 : index
    %0 = vector.load %arg2[%c0, %c0_0, %c0_1] : memref<1x4x256xf32, #tpu.memory_space<vmem>>, vector<1x4x256xf32>
    %c0_2 = arith.constant 0 : index
    %c0_3 = arith.constant 0 : index
    %c0_4 = arith.constant 0 : index
    %1 = vector.load %arg3[%c0_2, %c0_3, %c0_4] : memref<1x7x256xf32, #tpu.memory_space<vmem>>, vector<1x4x256xf32>
    tpu.vector_store %arg3[%c0_2, %c0_3, %c0_4], %0 {strides = array<i32>} : memref<1x7x256xf32, #tpu.memory_space<vmem>>, vector<1x4x256xf32>,
    %c256_i32 = arith.constant 256 : i32
    %2 = arith.muli %arg1, %c256_i32 : i32
    %3 = tpu.iota {dimensions = array<i32: 1>} : vector<1x256xi32>
    %4 = vector.broadcast %2 : i32 to vector<1x256xi32>
    %5 = arith.addi %4, %3 : vector<1x256xi32>
    %6 = arith.sitofp %5 : vector<1x256xi32> to vector<1x256xf32>
    %cst = arith.constant 1.600000e+01 : f32
    %7 = vector.broadcast %cst : f32 to vector<1x256xf32>
    %8 = arith.divf %6, %7 : vector<1x256xf32>
    %9 = math.floor %8 : vector<1x256xf32>
    %cst_5 = arith.constant 1.600000e+01 : f32
    %10 = vector.broadcast %cst_5 : f32 to vector<1x256xf32>
    %11 = arith.mulf %9, %10 : vector<1x256xf32>
    %12 = arith.subf %6, %11 : vector<1x256xf32>
    %cst_6 = arith.constant 0.000000e+00 : f32
    %13 = vector.broadcast %cst_6 : f32 to vector<1x256xf32>
    %14 = arith.cmpf olt, %12, %13 : vector<1x256xf32>
    %cst_7 = arith.constant 1.000000e+00 : f32
    %15 = vector.broadcast %cst_7 : f32 to vector<1x256xf32>
    %16 = arith.subf %9, %15 : vector<1x256xf32>
    %17 = arith.select %14, %16, %9 : vector<1x256xi1>, vector<1x256xf32>
    %cst_8 = arith.constant 1.600000e+01 : f32
    %18 = vector.broadcast %cst_8 : f32 to vector<1x256xf32>
    %19 = arith.addf %12, %18 : vector<1x256xf32>
    %20 = arith.select %14, %19, %12 : vector<1x256xi1>, vector<1x256xf32>
    %cst_9 = arith.constant 1.600000e+01 : f32
    %21 = vector.broadcast %cst_9 : f32 to vector<1x256xf32>
    %22 = arith.cmpf oge, %20, %21 : vector<1x256xf32>
    %cst_10 = arith.constant 1.000000e+00 : f32
    %23 = vector.broadcast %cst_10 : f32 to vector<1x256xf32>
    %24 = arith.addf %17, %23 : vector<1x256xf32>
    %25 = arith.select %22, %24, %17 : vector<1x256xi1>, vector<1x256xf32>
    %cst_11 = arith.constant 1.600000e+01 : f32
    %26 = vector.broadcast %cst_11 : f32 to vector<1x256xf32>
    %27 = arith.subf %20, %26 : vector<1x256xf32>
    %28 = arith.select %22, %27, %20 : vector<1x256xi1>, vector<1x256xf32>
    %cst_12 = arith.constant 0.13333334 : f32
    %29 = vector.broadcast %cst_12 : f32 to vector<1x256xf32>
    %30 = arith.mulf %25, %29 : vector<1x256xf32>
    %cst_13 = arith.constant 1.000000e+00 : f32
    %31 = vector.broadcast %cst_13 : f32 to vector<1x256xf32>
    %32 = arith.subf %30, %31 : vector<1x256xf32>
    %cst_14 = arith.constant 0.13333334 : f32
    %33 = vector.broadcast %cst_14 : f32 to vector<1x256xf32>
    %34 = arith.mulf %28, %33 : vector<1x256xf32>
    %cst_15 = arith.constant 1.000000e+00 : f32
    %35 = vector.broadcast %cst_15 : f32 to vector<1x256xf32>
    %36 = arith.subf %34, %35 : vector<1x256xf32>
    %37 = arith.mulf %32, %32 : vector<1x256xf32>
    %38 = arith.mulf %36, %36 : vector<1x256xf32>
    %39 = arith.addf %37, %38 : vector<1x256xf32>
    %40 = math.sqrt %39 : vector<1x256xf32>
    %41 = tpu.concatenate %32, %36, %40 in 0 : vector<1x256xf32>, vector<1x256xf32>, vector<1x256xf32> -> vector<3x256xf32>
    %42 = vector.shape_cast %41 : vector<3x256xf32> to vector<1x3x256xf32>
    %c0_16 = arith.constant 0 : index
    %c4 = arith.constant 4 : index
    %c0_17 = arith.constant 0 : index
    %43 = vector.load %arg3[%c0_16, %c4, %c0_17] : memref<1x7x256xf32, #tpu.memory_space<vmem>>, vector<1x3x256xf32>
    tpu.vector_store %arg3[%c0_16, %c4, %c0_17], %42 {strides = array<i32>} : memref<1x7x256xf32, #tpu.memory_space<vmem>>, vector<1x3x256xf32>,
    return
  }
  func.func @transform_0(%arg0: i32, %arg1: i32) -> (i32, i32, i32) {
    %c0_i32 = arith.constant 0 : i32
    %c0_i32_0 = arith.constant 0 : i32
    return %arg0, %c0_i32, %arg1 : i32, i32, i32
  }
  func.func @transform_1(%arg0: i32, %arg1: i32) -> (i32, i32, i32) {
    %c0_i32 = arith.constant 0 : i32
    %c0_i32_0 = arith.constant 0 : i32
    return %arg0, %c0_i32, %arg1 : i32, i32, i32
  }
}

</mosaic_0001>

<llo_original>
// kernel: tpu_custom_call.1
$region0: #{tpu_custom_call.1}
  #allocation0 [shape = 'u32[]', space=smem, size = 0x4, offset = 0x4, fixed_abs, tag = 'smem constant byte address 0x4 - core index']
  #allocation1 [shape = 'u32[144,128]{1,0:T(1,128)}', space=vmem, size = 0x12000, scoped, tag = 'internal scratch']
  %s0 = inlined_call_operand.hbm [shape: f32[2,4,256], index: 0, kind: input, shape index: {}]
  %s1 = inlined_call_operand.vmem [shape: f32[2,7,256], index: 1, kind: output, shape index: {}]
  %s2 = sld [smem:[#allocation0]]
  $region41: #{tpu_custom_call.1} parent=0
    _
  %s4 = ssub.s32 1, %s2
  %s5 = scalar_select 0, %s4, %s2
  $region1: #{tpu_custom_call.1} parent=0
    #allocation2 [shape = 'u8[8192]{0}', space=vmem, size = 0x2000, scoped, tag = 'input window, operand 0']
    #allocation3 [shape = 's32[2]{0}', space=sflag, size = 0x8, scoped, tag = 'scoped memory for tpu_custom_call.1']
    %6 = vsyncpa [#allocation3], 0
    %s7 = scalar_lea.sflag [#allocation3], 1
    %8 = vsyncpa %s7, 0
    loop: start=0, step=1, limit=4
    $region2: #{tpu_custom_call.1} parent=1 // loop_pre_header
      _
    $region3: #{tpu_custom_call.1} parent=1 // loop_header
      %s10 = sphi 0, %s14
      %p11 = scmp.ge.s32.totalorder %s10, 4
      %s17 = sphi 0, %s29
      %s18 = sphi 0, %s25
      %s19 = sphi 0, %s17
      %s20 = sphi 0, %s18
      %s21 = sphi 0, %s19
      %s22 = sphi 0, %s20
      %s34 = sphi 0, %s36
      %s37 = sphi 0, %s34
      %s38 = sphi 0, %s37
      %s54 = sphi 0, %s38
      %s62 = sphi 0, %s64
      %s65 = sphi 0, %s62
      %s66 = sphi 0, %s65
      %s82 = sphi 0, %s66
    $region4: #{tpu_custom_call.1} parent=1 // loop_header_branch
      %13 = sbr.rel (%p11) target = $region8
    $region5: #{tpu_custom_call.1} parent=1 // loop_body
      %s15 = ssub.s32 %s10, 1
      %s16 = ssub.s32 %s10, 2
      %s23 = sadd.s32 1, %s18
      %p24 = scmp.ge.s32.totalorder %s23, 1
      %s25 = scalar_select %p24, 0, %s23
      %s26 = sadd.s32 1, %s17
      %s27 = scalar_select %p24, %s26, %s17
      %p28 = scmp.ge.s32.totalorder %s27, 2
      %s29 = scalar_select %p28, 0, %s27
      %s30 = ssub.s32 %s17, %s29
      %s31 = ssub.s32 %s18, %s25
      %s32 = sor.u32 %s30, %s31
      %p33 = scmp.eq.s32.totalorder %s32, 0
      %s35 = sadd.s32 %s34, 1
      %s36 = scalar_select %p33, %s34, %s35
      %p39 = pneg %p33
      %p40 = scmp.eq.s32.totalorder %s10, 1
      %p41 = por %p39, %p40
      %p42 = scmp.ne.s32.totalorder %s34, %s37
      %p43 = scmp.eq.s32.totalorder %s10, 0
      %p44 = por %p42, %p43
      %p45 = scmp.ne.s32.totalorder %s34, %s37
      %p46 = scmp.eq.s32.totalorder %s15, 1
      %p47 = por %p45, %p46
      %p48 = scmp.ne.s32.totalorder %s37, %s38
      %p49 = scmp.eq.s32.totalorder %s15, 0
      %p50 = por %p48, %p49
      %p51 = scmp.ne.s32.totalorder %s37, %s38
      %p52 = scmp.eq.s32.totalorder %s16, 1
      %p53 = por %p51, %p52
      %p55 = scmp.ne.s32.totalorder %s38, %s54
      %p56 = scmp.eq.s32.totalorder %s16, 0
      %p57 = por %p55, %p56
      %s58 = ssub.s32 %s17, %s29
      %s59 = ssub.s32 %s18, %s25
      %s60 = sor.u32 %s58, %s59
      %p61 = scmp.eq.s32.totalorder %s60, 0
      %s63 = sadd.s32 %s62, 1
      %s64 = scalar_select %p61, %s62, %s63
      %p67 = pneg %p61
      %p68 = scmp.eq.s32.totalorder %s10, 1
      %p69 = por %p67, %p68
      %p70 = scmp.ne.s32.totalorder %s62, %s65
      %p71 = scmp.eq.s32.totalorder %s10, 0
      %p72 = por %p70, %p71
      %p73 = scmp.ne.s32.totalorder %s62, %s65
      %p74 = scmp.eq.s32.totalorder %s15, 1
      %p75 = por %p73, %p74
      %p76 = scmp.ne.s32.totalorder %s65, %s66
      %p77 = scmp.eq.s32.totalorder %s15, 0
      %p78 = por %p76, %p77
      %p79 = scmp.ne.s32.totalorder %s65, %s66
      %p80 = scmp.eq.s32.totalorder %s16, 1
      %p81 = por %p79, %p80
      %p83 = scmp.ne.s32.totalorder %s66, %s82
      %p84 = scmp.eq.s32.totalorder %s16, 0
      %p85 = por %p83, %p84
      %p86 = scmp.le.s32.totalorder 1, %s10
      %p87 = scmp.lt.s32.totalorder %s10, 3
      %p88 = pnand %p86, %p87
      %p89 = pneg %p88
      // Predicated region
      $region9: #{tpu_custom_call.1} parent=5 // pred_check
        _
      $region10: #{tpu_custom_call.1} parent=5 // pred_check_branch
        %91 = sbr.rel (%p88) target = $region12
      $region11: #{tpu_custom_call.1} parent=5 // pred_region
        %s92 = ssub.s32 %s10, 1
      $region12: #{tpu_custom_call.1} parent=5 // pred_fallthru
        _
      %p93 = scmp.lt.s32.totalorder %s10, 2
      // Predicated region
      $region13: #{tpu_custom_call.1} parent=5 // pred_check
        %p94 = pneg %p93
      $region14: #{tpu_custom_call.1} parent=5 // pred_check_branch
        %96 = sbr.rel (%p94) target = $region16
      $region15: #{tpu_custom_call.1} parent=5 // pred_region
        // Predicated region
        $region17: #{tpu_custom_call.1} parent=15 // pred_check
          %p97 = pneg %p44
        $region18: #{tpu_custom_call.1} parent=15 // pred_check_branch
          %99 = sbr.rel (%p97) target = $region20
        $region19: #{tpu_custom_call.1} parent=15 // pred_region
          %s100 = sand.u32 %s34, 1
          %s101 = scalar_lea.sflag [#allocation3], %s100
          %s102 = sand.u32 %s34, 1
          %s103 = smul.addr %s102, 8
          %s104 = scalar_lea.vmem [#allocation2], %s103
          %s105 = smul.u32 2, %s18
          %s107 = ssub.s32 128, 128
          %108 = vsyncadd %s101, %s107
          %s109 = smul.addr %s17, 2
          %s110 = sadd.s32 %s105, %s109
          %s111 = smul.addr %s110, 64
          %s112 = scalar_lea.hbm %s0, %s111
          %s114 = sshll.u32 %s104, 4
          %s115 = int_to_ptr.vmem [resolvable:$true] %s114
          %117 = dma.hbm_to_vmem [thread:$0]  %s112, 128, %s115, %s101
        $region20: #{tpu_custom_call.1} parent=15 // pred_fallthru
          _
      $region16: #{tpu_custom_call.1} parent=5 // pred_fallthru
        _
      %p118 = scmp.le.s32.totalorder 1, %s10
      %p119 = scmp.lt.s32.totalorder %s10, 3
      %p120 = pnand %p118, %p119
      %p121 = pneg %p120
      // Predicated region
      $region21: #{tpu_custom_call.1} parent=5 // pred_check
        _
      $region22: #{tpu_custom_call.1} parent=5 // pred_check_branch
        %123 = sbr.rel (%p120) target = $region24
      $region23: #{tpu_custom_call.1} parent=5 // pred_region
        %s124 = ssub.s32 %s10, 1
        %s125 = sand.u32 %s37, 1
        %s126 = scalar_lea.sflag [#allocation3], %s125
        %s127 = sand.u32 %s37, 1
        %s128 = smul.addr %s127, 8
        %s129 = scalar_lea.vmem [#allocation2], %s128
        // Predicated region
        $region25: #{tpu_custom_call.1} parent=23 // pred_check
          %p130 = pneg %p50
        $region26: #{tpu_custom_call.1} parent=23 // pred_check_branch
          %132 = sbr.rel (%p130) target = $region28
        $region27: #{tpu_custom_call.1} parent=23 // pred_region
          %133 = dma.done %s126, 128
        $region28: #{tpu_custom_call.1} parent=23 // pred_fallthru
          _
        %s134 = sand.u32 %s37, 1
        %s135 = scalar_lea.sflag [#allocation3], %s134
        %s136 = sand.u32 %s37, 1
        %s137 = smul.addr %s136, 8
        %s138 = scalar_lea.vmem [#allocation2], %s137
        %p139 = pneg %p50
        %p140 = pneg %p47
        %p141 = pneg %p78
        %p142 = pneg %p75
        %s143 = smul.u32 2, %s20
        %p144 = scmp.lt.s32.totalorder %s19, 1
        %s145 = scalar_select %p144, %s19, 1
        %p146 = scmp.lt.s32.totalorder %s143, 1
        %s147 = scalar_select %p146, %s143, 1
        %s148 = smul.addr %s145, 2
        %s149 = sadd.s32 %s147, %s148
        %s150 = smul.addr %s149, 8
        %s151 = scalar_lea.vmem %s1, %s150
        %s152 = smul.u32 2, %s20
        %s153 = smul.u32 2, %s20
        %p154 = scmp.lt.s32.totalorder %s19, 1
        %s155 = scalar_select %p154, %s19, 1
        %p156 = scmp.lt.s32.totalorder %s153, 1
        %s157 = scalar_select %p156, %s153, 1
        %s158 = smul.addr %s155, 2
        %s159 = sadd.s32 %s157, %s158
        %s160 = smul.addr %s159, 8
        %s161 = scalar_lea.vmem %s1, %s160
        %s162 = smul.u32 2, %s20
        %v163 = vld [vmem:[%s129] sm:$0xff]
        %v165 = vcombine.high %v163, %v163
        %167 = vst [vmem:[%s161] sm:$0xf] %v163
        %168 = vst [vmem:[%s161 + $0x8] sm:$0xf] %v165
        %s169 = smul.u32 %s20, 256
        %v170 = vlaneseq
        %v171 = vand.u32 %v170, 127
        %v172 = vadd.s32 %v171, 128
        %v173 = vstv %s169
        %v174 = vadd.s32 %v173, %v171
        %v175 = vadd.s32 %v173, %v172
        %v176 = vcvt.s32.f32 %v174
        %v177 = vcvt.s32.f32 %v175
        %v178 = vrcp.pop 16.0
        %v179 = vmul.f32 %v176, %v178
        %v180 = vmul.f32 %v177, %v178
        %v181 = vfloor.f32 %v179
        %v182 = vfloor.f32 %v180
        %v183 = vmul.f32 %v181, 16.0
        %v184 = vmul.f32 %v182, 16.0
        %v185 = vsub.f32 %v176, %v183
        %v186 = vsub.f32 %v177, %v184
        %vm187 = vcmp.lt.f32.partialorder %v185, 0.0
        %vm188 = vcmp.lt.f32.partialorder %v186, 0.0
        %v189 = vsub.f32 %v181, 1.0
        %v190 = vsub.f32 %v182, 1.0
        %v191 = vsel %vm187, %v189, %v181
        %v192 = vsel %vm188, %v190, %v182
        %v193 = vadd.f32 %v185, 16.0
        %v194 = vadd.f32 %v186, 16.0
        %v195 = vsel %vm187, %v193, %v185
        %v196 = vsel %vm188, %v194, %v186
        %vm197 = vcmp.ge.f32.partialorder %v195, 16.0
        %vm198 = vcmp.ge.f32.partialorder %v196, 16.0
        %v199 = vadd.f32 %v191, 1.0
        %v200 = vadd.f32 %v192, 1.0
        %v201 = vsel %vm197, %v199, %v191
        %v202 = vsel %vm198, %v200, %v192
        %v203 = vsub.f32 %v195, 16.0
        %v204 = vsub.f32 %v196, 16.0
        %v205 = vsel %vm197, %v203, %v195
        %v206 = vsel %vm198, %v204, %v196
        %v207 = vmul.f32 %v201, 0.13333334
        %v208 = vmul.f32 %v202, 0.13333334
        %v209 = vsub.f32 %v207, 1.0
        %v210 = vsub.f32 %v208, 1.0
        %v211 = vmul.f32 %v205, 0.13333334
        %v212 = vmul.f32 %v206, 0.13333334
        %v213 = vsub.f32 %v211, 1.0
        %v214 = vsub.f32 %v212, 1.0
        %v215 = vmul.f32 %v209, %v209
        %v216 = vmul.f32 %v210, %v210
        %v217 = vmul.f32 %v213, %v213
        %v218 = vmul.f32 %v214, %v214
        %v219 = vadd.f32 %v215, %v217
        %v220 = vadd.f32 %v216, %v218
        %v221 = vrsqrt.pop %v219
        %v222 = vmul.f32 %v219, %v221
        %vm223 = vcmp.eq.f32.partialorder %v219, inf
        %v224 = vsel %vm223, %v219, %v222
        %vm225 = vcmp.eq.f32.partialorder %v219, 0.0
        %v226 = vand.u32 %v219, 2147483648
        %v227 = vsel %vm225, %v226, %v224
        %v228 = vrsqrt.pop %v220
        %v229 = vmul.f32 %v220, %v228
        %vm230 = vcmp.eq.f32.partialorder %v220, inf
        %v231 = vsel %vm230, %v220, %v229
        %vm232 = vcmp.eq.f32.partialorder %v220, 0.0
        %v233 = vand.u32 %v220, 2147483648
        %v234 = vsel %vm232, %v233, %v231
        %vm235 = vcmask 1040384
        %v236 = vsel %vm235, %v209, %v213
        %v237 = vsel %vm235, %v210, %v214
        %vm238 = vcmask 1041408
        %v239 = vsel %vm238, %v236, %v227
        %v240 = vsel %vm238, %v237, %v234
        %v243 = vrot.slane %v239, 4
        %v244 = vrot.slane %v240, 4
        %247 = vst [vmem:[%s161] sm:$0x70] %v243
        %248 = vst [vmem:[%s161 + $0x8] sm:$0x70] %v244
        %s249 = smul.u32 2, %s20
        %p250 = scmp.lt.s32.totalorder %s19, 1
        %s251 = scalar_select %p250, %s19, 1
        %p252 = scmp.lt.s32.totalorder %s249, 1
        %s253 = scalar_select %p252, %s249, 1
        %s254 = smul.addr %s251, 2
        %s255 = sadd.s32 %s253, %s254
        %s256 = smul.addr %s255, 8
        %s257 = scalar_lea.vmem %s1, %s256
        // Predicated region
        $region29: #{tpu_custom_call.1} parent=23 // pred_check
          %p258 = pneg %p75
        $region30: #{tpu_custom_call.1} parent=23 // pred_check_branch
          %260 = sbr.rel (%p258) target = $region32
        $region31: #{tpu_custom_call.1} parent=23 // pred_region
          %s261 = smul.u32 2, %s20
        $region32: #{tpu_custom_call.1} parent=23 // pred_fallthru
          _
      $region24: #{tpu_custom_call.1} parent=5 // pred_fallthru
        _
      %p262 = scmp.le.s32.totalorder 2, %s10
      // Predicated region
      $region33: #{tpu_custom_call.1} parent=5 // pred_check
        %p263 = pneg %p262
      $region34: #{tpu_custom_call.1} parent=5 // pred_check_branch
        %265 = sbr.rel (%p263) target = $region36
      $region35: #{tpu_custom_call.1} parent=5 // pred_region
        %s266 = ssub.s32 %s10, 2
        // Predicated region
        $region37: #{tpu_custom_call.1} parent=35 // pred_check
          %p267 = pneg %p81
        $region38: #{tpu_custom_call.1} parent=35 // pred_check_branch
          %269 = sbr.rel (%p267) target = $region40
        $region39: #{tpu_custom_call.1} parent=35 // pred_region
          %s270 = smul.u32 2, %s22
          %p271 = scmp.lt.s32.totalorder %s21, 1
          %s272 = scalar_select %p271, %s21, 1
          %p273 = scmp.lt.s32.totalorder %s270, 1
          %s274 = scalar_select %p273, %s270, 1
          %s275 = smul.addr %s272, 2
          %s276 = sadd.s32 %s274, %s275
          %s277 = smul.addr %s276, 8
          %s278 = scalar_lea.vmem %s1, %s277
        $region40: #{tpu_custom_call.1} parent=35 // pred_fallthru
          _
      $region36: #{tpu_custom_call.1} parent=5 // pred_fallthru
        _
    $region6: #{tpu_custom_call.1} parent=1 // loop_footer
      %s14 = sadd.s32 1, %s10
    $region7: #{tpu_custom_call.1} parent=1 // loop_footer_branch
      %9 = sbr.rel target = $region3
    $region8: #{tpu_custom_call.1} parent=1 // loop_exit
      _
    %279 = vsyncpa [#allocation3], 1
    %s280 = scalar_lea.sflag [#allocation3], 1
    %281 = vsyncpa %s280, 1

</llo_original>
